<compile_context>
chip_gen: v7x
topology: tpu7x:2x2x1
jax: 0.10.0
libtpu: 0.0.40
codegen_flags: <defaults>
</compile_context>

<pallas_src>
import jax
import jax.numpy as jnp
from jax import lax
from jax.experimental import pallas as pl
from jax.experimental.pallas import tpu as pltpu

# Batch-tile lane width. For very large N on v6e/v5e, sweeping {1024, 2048,
# 4096} amortizes per-step overhead further; 1024 keeps N=1000 a single step.
_MAX_BN = 1024


def _round_up(n, m):
    return ((n + m - 1) // m) * m


# ----------------------------- kernels --------------------------------------


def _net_kernel_small(xT_ref, w1_ref, b1_ref, w2_ref, b2_ref, oT_ref):
    """Degenerate-size path (tiny F / O): VPU outer products + XLU reduce.

    xT: (F, bn) VMEM    w1: (Hp, F) VMEM    b1: (Hp, 1) VMEM
    w2: (Hp, O) VMEM    b2: (O,)    SMEM    oT: (O, bn) VMEM
    """
    x = xT_ref[...]                       # (F, bn)
    w1 = w1_ref[...]                      # (Hp, F)
    w2 = w2_ref[...]                      # (Hp, O)

    n_feat = x.shape[0]                   # static (1 for this module)
    n_out = oT_ref.shape[0]               # static (1 for this module)

    # hidden = relu(W1 @ x + b1).  K == n_feat is tiny, so accumulate the
    # outer products on the VPU ((Hp,1)*(1,bn) broadcast) instead of feeding
    # the MXU a K=1 matmul.
    h = w1[:, 0:1] * x[0:1, :]                         # (Hp, bn)
    for f in range(1, n_feat):                         # static, unrolled
        h = h + w1[:, f:f + 1] * x[f:f + 1, :]
    h = jnp.maximum(h + b1_ref[...], 0.0)              # (Hp, bn), lane-dense

    # out = W2 @ h + b2.  N == n_out is tiny, so do a sublane reduce per
    # output row (XLU); the bias comes from SMEM as a scalar splat.
    rows = [
        jnp.sum(w2[:, o:o + 1] * h, axis=0, keepdims=True) + b2_ref[o]
        for o in range(n_out)                          # static, unrolled
    ]
    y = rows[0] if n_out == 1 else jnp.concatenate(rows, axis=0)  # (O, bn)
    oT_ref[...] = y.astype(oT_ref.dtype)


def _net_kernel_mxu(xT_ref, w1_ref, b1_ref, w2_ref, b2_ref, oT_ref):
    """General path (F/O/H big enough to feed the MXU).

    xT: (F, bn) VMEM    w1: (Hp, F) VMEM    b1: (Hp, 1) VMEM
    w2: (Hp, O) VMEM    b2: (O, 1)  VMEM    oT: (O, bn) VMEM
    """
    h = jnp.dot(w1_ref[...], xT_ref[...],
                preferred_element_type=jnp.float32)    # (Hp, bn)
    h = jnp.maximum(h + b1_ref[...], 0.0)
    # Contract the Hp axis of (Hp, O) with (Hp, bn) -> (O, bn) == W2 @ h,
    # without materializing a transpose of w2.
    y = lax.dot_general(w2_ref[...], h,
                        dimension_numbers=(((0,), (0,)), ((), ())),
                        preferred_element_type=jnp.float32)
    oT_ref[...] = (y + b2_ref[...]).astype(oT_ref.dtype)


# ----------------------------- wrappers -------------------------------------


def prepare_params(w1, b1, w2, b2):
    """One-time layout/padding prep (hoisted out of the per-call forward).

    PyTorch layouts in:  w1 (H, F), b1 (H,), w2 (O, H), b2 (O,)
    Kernel layouts out:  w1_p (h_pad, F), b1_p (h_pad, 1), w2_p (h_pad, O),
                         b2 (O,)   with h_pad = round_up(H, 8).
    Zero-padded hidden rows have zero weight in w2_p, so they contribute 0.
    """
    H, F = w1.shape
    O = w2.shape[0]
    assert b1.shape == (H,) and w2.shape == (O, H) and b2.shape == (O,)
    h_pad = _round_up(max(H, 8), 8)
    w1_p = jnp.zeros((h_pad, F), w1.dtype).at[:H, :].set(w1)
    b1_p = jnp.zeros((h_pad, 1), b1.dtype).at[:H, 0].set(b1)
    w2_p = jnp.zeros((h_pad, O), w2.dtype).at[:H, :].set(w2.T)
    return w1_p, b1_p, w2_p, b2


@jax.jit
def net_forward(x, w1_p, b1_p, w2_p, b2):
    """Forward pass of Net.  x: (N, n_feature)  ->  (N, n_out)."""
    N, F = x.shape
    h_pad = w1_p.shape[0]
    O = w2_p.shape[1]

    # Batch tile: single grid step when the padded batch fits one 1024-lane
    # tile; 1024-lane tiles + "parallel" axis for large N (megacore on v7x).
    bn = min(_MAX_BN, _round_up(N, 128))
    n_pad = _round_up(N, bn)

    # Lane-dense layout: batch on the 128-lane axis.  One cheap op for xT
    # (reshape is free for F==1); padded columns are sliced off at the end.
    xT = x.reshape(1, N) if F == 1 else x.T
    if n_pad != N:
        xT = jnp.pad(xT, ((0, 0), (0, n_pad - N)))

    use_mxu = (F >= 8) or (O >= 8) or (h_pad >= 128)
    if use_mxu:
        kernel = _net_kernel_mxu
        b2_arg = b2.reshape(O, 1)
        b2_spec = pl.BlockSpec((O, 1), lambda i: (0, 0))
    else:
        kernel = _net_kernel_small
        b2_arg = b2                                   # (O,) scalar(s) in SMEM
        b2_spec = pl.BlockSpec(memory_space=pltpu.MemorySpace.SMEM)

    yT = pl.pallas_call(
        kernel,
        out_shape=jax.ShapeDtypeStruct((O, n_pad), x.dtype),
        grid_spec=pltpu.PrefetchScalarGridSpec(
            num_scalar_prefetch=0,
            grid=(n_pad // bn,),
            in_specs=[
                # activations: tile the batch (lane) dimension
                pl.BlockSpec((F, bn), lambda i: (0, i)),
                # parameters: whole arrays, constant index_map -> no re-DMA
                pl.BlockSpec((h_pad, F), lambda i: (0, 0)),
                pl.BlockSpec((h_pad, 1), lambda i: (0, 0)),
                pl.BlockSpec((h_pad, O), lambda i: (0, 0)),
                b2_spec,
            ],
            out_specs=pl.BlockSpec((O, bn), lambda i: (0, i)),
        ),
        compiler_params=pltpu.CompilerParams(
            dimension_semantics=("parallel",)
        ),
    )(xT, w1_p, b1_p, w2_p, b2_arg)

    return yT[:, :N].T                    # back to (N, n_out)


def init_params(key, n_feature, n_hidden, n_out):
    """PyTorch-style init: U(-1/sqrt(fan_in), 1/sqrt(fan_in)), (out,in) layout."""
    k1, k2, k3, k4 = jax.random.split(key, 4)
    bound1 = 1.0 / jnp.sqrt(jnp.float32(n_feature))
    bound2 = 1.0 / jnp.sqrt(jnp.float32(n_hidden))
    w1 = jax.random.uniform(k1, (n_hidden, n_feature), jnp.float32, -bound1, bound1)
    b1 = jax.random.uniform(k2, (n_hidden,), jnp.float32, -bound1, bound1)
    w2 = jax.random.uniform(k3, (n_out, n_hidden), jnp.float32, -bound2, bound2)
    b2 = jax.random.uniform(k4, (n_out,), jnp.float32, -bound2, bound2)
    return w1, b1, w2, b2


if __name__ == "__main__":
    # Matches the source script: Net(n_feature=1, n_hidden=20, n_out=1) fed
    # with x = linspace(-1, 1, 1000)[:, None].  N=1000 is not a multiple of
    # 128 and is handled by the (fused, jitted) wrapper-side padding.
    n_feature, n_hidden, n_out = 1, 20, 1
    N = 1000

    key = jax.random.PRNGKey(0)
    w1, b1, w2, b2 = init_params(key, n_feature, n_hidden, n_out)
    params = prepare_params(w1, b1, w2, b2)   # one-time padding / layout prep

    x = jnp.linspace(-1.0, 1.0, N, dtype=jnp.float32).reshape(N, n_feature)

    out = net_forward(x, *params)
    out = jax.block_until_ready(out)

    # reference check in plain JAX (PyTorch semantics: x @ W.T + b)
    ref = jnp.maximum(x @ w1.T + b1, 0.0) @ w2.T + b2
    assert out.shape == (N, n_out)
    assert jnp.allclose(out, ref, atol=1e-5, rtol=1e-5)

    print("KERNEL_OK")
</pallas_src>

<mosaic_0001>
module attributes {stable_mosaic.version = 11 : i64} {
  func.func @_net_kernel_small(%arg0: i32, %arg1: memref<1x1024xf32, #tpu.memory_space<vmem>>, %arg2: memref<24x1xf32, #tpu.memory_space<vmem>>, %arg3: memref<24x1xf32, #tpu.memory_space<vmem>>, %arg4: memref<24x1xf32, #tpu.memory_space<vmem>>, %arg5: memref<1xf32, #tpu.memory_space<smem>>, %arg6: memref<1x1024xf32, #tpu.memory_space<vmem>>) attributes {dimension_semantics = [#tpu.dimension_semantics<parallel>], iteration_bounds = array<i64: 1>, scalar_prefetch = 0 : i64, scratch_operands = 0 : i64, tpu.core_type = #tpu.core_type<tc>, window_params = [{transform_indices = @transform_0, window_bounds = array<i64: 1, 1024>}, {pipeline_mode = #tpu.pipeline_mode<synchronous>, transform_indices = @transform_1, window_bounds = array<i64: 24, 1>}, {pipeline_mode = #tpu.pipeline_mode<synchronous>, transform_indices = @transform_2, window_bounds = array<i64: 24, 1>}, {pipeline_mode = #tpu.pipeline_mode<synchronous>, transform_indices = @transform_3, window_bounds = array<i64: 24, 1>}, {transform_indices = @transform_4, window_bounds = array<i64: 1>}, {transform_indices = @transform_5, window_bounds = array<i64: 1, 1024>}]} {
    %c0 = arith.constant 0 : index
    %c0_0 = arith.constant 0 : index
    %0 = vector.load %arg1[%c0, %c0_0] : memref<1x1024xf32, #tpu.memory_space<vmem>>, vector<1x1024xf32>
    %c0_1 = arith.constant 0 : index
    %c0_2 = arith.constant 0 : index
    %1 = vector.load %arg2[%c0_1, %c0_2] : memref<24x1xf32, #tpu.memory_space<vmem>>, vector<24x1xf32>
    %c0_3 = arith.constant 0 : index
    %c0_4 = arith.constant 0 : index
    %2 = vector.load %arg4[%c0_3, %c0_4] : memref<24x1xf32, #tpu.memory_space<vmem>>, vector<24x1xf32>
    %3 = vector.broadcast %1 : vector<24x1xf32> to vector<24x1024xf32>
    %4 = vector.broadcast %0 : vector<1x1024xf32> to vector<24x1024xf32>
    %5 = arith.mulf %3, %4 : vector<24x1024xf32>
    %c0_5 = arith.constant 0 : index
    %c0_6 = arith.constant 0 : index
    %6 = vector.load %arg3[%c0_5, %c0_6] : memref<24x1xf32, #tpu.memory_space<vmem>>, vector<24x1xf32>
    %7 = vector.broadcast %6 : vector<24x1xf32> to vector<24x1024xf32>
    %8 = arith.addf %5, %7 : vector<24x1024xf32>
    %cst = arith.constant 0.000000e+00 : f32
    %9 = vector.broadcast %cst : f32 to vector<24x1024xf32>
    %10 = arith.maximumf %8, %9 : vector<24x1024xf32>
    %11 = vector.broadcast %2 : vector<24x1xf32> to vector<24x1024xf32>
    %12 = arith.mulf %11, %10 : vector<24x1024xf32>
    %cst_7 = arith.constant dense<0.000000e+00> : vector<1024xf32>
    %13 = vector.multi_reduction <add>, %12, %cst_7 [0] : vector<24x1024xf32> to vector<1024xf32>
    %14 = vector.shape_cast %13 : vector<1024xf32> to vector<1x1024xf32>
    %c0_8 = arith.constant 0 : index
    %15 = memref.load %arg5[%c0_8] : memref<1xf32, #tpu.memory_space<smem>>
    %16 = vector.broadcast %15 : f32 to vector<1x1024xf32>
    %17 = arith.addf %14, %16 : vector<1x1024xf32>
    %c0_9 = arith.constant 0 : index
    %c0_10 = arith.constant 0 : index
    %18 = vector.load %arg6[%c0_9, %c0_10] : memref<1x1024xf32, #tpu.memory_space<vmem>>, vector<1x1024xf32>
    tpu.vector_store %arg6[%c0_9, %c0_10], %17 {strides = array<i32>} : memref<1x1024xf32, #tpu.memory_space<vmem>>, vector<1x1024xf32>,
    return
  }
  func.func @transform_0(%arg0: i32) -> (i32, i32) {
    %c0_i32 = arith.constant 0 : i32
    %c0_i32_0 = arith.constant 0 : i32
    return %c0_i32, %arg0 : i32, i32
  }
  func.func @transform_1(%arg0: i32) -> (i32, i32) {
    %c0_i32 = arith.constant 0 : i32
    %c0_i32_0 = arith.constant 0 : i32
    %c0_i32_1 = arith.constant 0 : i32
    return %c0_i32, %c0_i32_0 : i32, i32
  }
  func.func @transform_2(%arg0: i32) -> (i32, i32) {
    %c0_i32 = arith.constant 0 : i32
    %c0_i32_0 = arith.constant 0 : i32
    %c0_i32_1 = arith.constant 0 : i32
    return %c0_i32, %c0_i32_0 : i32, i32
  }
  func.func @transform_3(%arg0: i32) -> (i32, i32) {
    %c0_i32 = arith.constant 0 : i32
    %c0_i32_0 = arith.constant 0 : i32
    %c0_i32_1 = arith.constant 0 : i32
    return %c0_i32, %c0_i32_0 : i32, i32
  }
  func.func @transform_4(%arg0: i32) -> i32 {
    %c0_i32 = arith.constant 0 : i32
    %c0_i32_0 = arith.constant 0 : i32
    return %c0_i32 : i32
  }
  func.func @transform_5(%arg0: i32) -> (i32, i32) {
    %c0_i32 = arith.constant 0 : i32
    %c0_i32_0 = arith.constant 0 : i32
    return %c0_i32, %arg0 : i32, i32
  }
}

</mosaic_0001>

<llo_original>
// kernel: net_forward.1
$region0: #{net_forward.1}
  #allocation0 [shape = 'u32[]', space=smem, size = 0x4, offset = 0x4, fixed_abs, tag = 'smem constant byte address 0x4 - core index']
  #allocation1 [shape = 'u32[144,128]{1,0:T(1,128)}', space=vmem, size = 0x12000, scoped, tag = 'internal scratch']
  #allocation2 [shape = 'f32[1]{0:T(128)S(6)}', space=smem, size = 0x200, scoped, tag = 'scoped memory for net_forward.1']
  %s0 = inlined_call_operand.vmem [shape: f32[1,1024], index: 0, kind: input, shape index: {}]
  %s1 = inlined_call_operand.vmem [shape: f32[24,1], index: 1, kind: input, shape index: {}]
  %s2 = inlined_call_operand.vmem [shape: f32[24,1], index: 2, kind: input, shape index: {}]
  %s3 = inlined_call_operand.vmem [shape: f32[24,1], index: 3, kind: input, shape index: {}]
  %s4 = inlined_call_operand.<no memory space> [shape: f32[1], index: 4, kind: input, shape index: {}]
  %s5 = inlined_call_operand.vmem [shape: f32[1,1024], index: 5, kind: output, shape index: {}]
  %s6 = sld [smem:[#allocation0]]
  $region30: #{net_forward.1} parent=0
    _
  %s8 = ssub.s32 1, %s6
  %s9 = scalar_select 0, %s8, %s6
  %10 = sst [smem:[#allocation2]] %s4
  // Predicated region
  $region2: #{net_forward.1} parent=0 // pred_check
    _
  $region3: #{net_forward.1} parent=0 // pred_check_branch
    %12 = sbr.rel (0) target = $region5
  $region4: #{net_forward.1} parent=0 // pred_region
    _
  $region5: #{net_forward.1} parent=0 // pred_fallthru
    _
  // Predicated region
  $region6: #{net_forward.1} parent=0 // pred_check
    _
  $region7: #{net_forward.1} parent=0 // pred_check_branch
    %14 = sbr.rel (0) target = $region9
  $region8: #{net_forward.1} parent=0 // pred_region
    _
  $region9: #{net_forward.1} parent=0 // pred_fallthru
    _
  // Predicated region
  $region10: #{net_forward.1} parent=0 // pred_check
    _
  $region11: #{net_forward.1} parent=0 // pred_check_branch
    %16 = sbr.rel (0) target = $region13
  $region12: #{net_forward.1} parent=0 // pred_region
    _
  $region13: #{net_forward.1} parent=0 // pred_fallthru
    _
  // Predicated region
  $region14: #{net_forward.1} parent=0 // pred_check
    _
  $region15: #{net_forward.1} parent=0 // pred_check_branch
    %18 = sbr.rel (0) target = $region17
  $region16: #{net_forward.1} parent=0 // pred_region
    _
  $region17: #{net_forward.1} parent=0 // pred_fallthru
    _
  // Predicated region
  $region18: #{net_forward.1} parent=0 // pred_check
    _
  $region19: #{net_forward.1} parent=0 // pred_check_branch
    %20 = sbr.rel (0) target = $region21
  $region20: #{net_forward.1} parent=0 // pred_region
    _
  $region21: #{net_forward.1} parent=0 // pred_fallthru
    _
  %v21 = vld [vmem:[%s0] sm:$0xff]
  %v22 = vld [vmem:[%s1] sm:$0xff]
  %v23 = vld [vmem:[%s1 + $0x8] sm:$0xff]
  %v24 = vld [vmem:[%s1 + $0x10] sm:$0xff]
  %v25 = vld [vmem:[%s3] sm:$0xff]
  %v26 = vld [vmem:[%s3 + $0x8] sm:$0xff]
  %v27 = vld [vmem:[%s3 + $0x10] sm:$0xff]
  %29 = vset.pattern.permute.xlu0 0
  %30 = vperm.xlu0 %29, %v22
  %v31 = vpop.permute.xlu0 %30
  %34 = vset.pattern.permute.xlu0 0
  %35 = vperm.xlu0 %34, %v23
  %v36 = vpop.permute.xlu0 %35
  %39 = vset.pattern.permute.xlu0 0
  %40 = vperm.xlu0 %39, %v24
  %v41 = vpop.permute.xlu0 %40
  %v44 = vlaneseq
  %v45 = vshrl.u32 %v44, 7
  %v46 = vsub.s32 0, %v45
  %v47 = vrot.slane %v21, %v46
  %v48 = vlaneseq
  %v49 = vshrl.u32 %v48, 7
  %v50 = vsub.s32 1, %v49
  %v51 = vrot.slane %v21, %v50
  %v52 = vlaneseq
  %v53 = vshrl.u32 %v52, 7
  %v54 = vsub.s32 2, %v53
  %v55 = vrot.slane %v21, %v54
  %v56 = vlaneseq
  %v57 = vshrl.u32 %v56, 7
  %v58 = vsub.s32 3, %v57
  %v59 = vrot.slane %v21, %v58
  %v60 = vlaneseq
  %v61 = vshrl.u32 %v60, 7
  %v62 = vsub.s32 4, %v61
  %v63 = vrot.slane %v21, %v62
  %v64 = vlaneseq
  %v65 = vshrl.u32 %v64, 7
  %v66 = vsub.s32 5, %v65
  %v67 = vrot.slane %v21, %v66
  %v68 = vlaneseq
  %v69 = vshrl.u32 %v68, 7
  %v70 = vsub.s32 6, %v69
  %v71 = vrot.slane %v21, %v70
  %v72 = vlaneseq
  %v73 = vshrl.u32 %v72, 7
  %v74 = vsub.s32 7, %v73
  %v75 = vrot.slane %v21, %v74
  %v84 = vmul.f32 %v31, %v47
  %v85 = vmul.f32 %v31, %v51
  %v86 = vmul.f32 %v31, %v55
  %v87 = vmul.f32 %v31, %v59
  %v88 = vmul.f32 %v31, %v63
  %v89 = vmul.f32 %v31, %v67
  %v90 = vmul.f32 %v31, %v71
  %v91 = vmul.f32 %v31, %v75
  %v92 = vmul.f32 %v36, %v47
  %v93 = vmul.f32 %v36, %v51
  %v94 = vmul.f32 %v36, %v55
  %v95 = vmul.f32 %v36, %v59
  %v96 = vmul.f32 %v36, %v63
  %v97 = vmul.f32 %v36, %v67
  %v98 = vmul.f32 %v36, %v71
  %v99 = vmul.f32 %v36, %v75
  %v100 = vmul.f32 %v41, %v47
  %v101 = vmul.f32 %v41, %v51
  %v102 = vmul.f32 %v41, %v55
  %v103 = vmul.f32 %v41, %v59
  %v104 = vmul.f32 %v41, %v63
  %v105 = vmul.f32 %v41, %v67
  %v106 = vmul.f32 %v41, %v71
  %v107 = vmul.f32 %v41, %v75
  %v108 = vld [vmem:[%s2] sm:$0xff]
  %v109 = vld [vmem:[%s2 + $0x8] sm:$0xff]
  %v110 = vld [vmem:[%s2 + $0x10] sm:$0xff]
  %112 = vset.pattern.permute.xlu0 0
  %113 = vperm.xlu0 %112, %v108
  %v114 = vpop.permute.xlu0 %113
  %117 = vset.pattern.permute.xlu0 0
  %118 = vperm.xlu0 %117, %v109
  %v119 = vpop.permute.xlu0 %118
  %122 = vset.pattern.permute.xlu0 0
  %123 = vperm.xlu0 %122, %v110
  %v124 = vpop.permute.xlu0 %123
  %v126 = vadd.f32 %v84, %v114
  %v127 = vadd.f32 %v85, %v114
  %v128 = vadd.f32 %v86, %v114
  %v129 = vadd.f32 %v87, %v114
  %v130 = vadd.f32 %v88, %v114
  %v131 = vadd.f32 %v89, %v114
  %v132 = vadd.f32 %v90, %v114
  %v133 = vadd.f32 %v91, %v114
  %v134 = vadd.f32 %v92, %v119
  %v135 = vadd.f32 %v93, %v119
  %v136 = vadd.f32 %v94, %v119
  %v137 = vadd.f32 %v95, %v119
  %v138 = vadd.f32 %v96, %v119
  %v139 = vadd.f32 %v97, %v119
  %v140 = vadd.f32 %v98, %v119
  %v141 = vadd.f32 %v99, %v119
  %v142 = vadd.f32 %v100, %v124
  %v143 = vadd.f32 %v101, %v124
  %v144 = vadd.f32 %v102, %v124
  %v145 = vadd.f32 %v103, %v124
  %v146 = vadd.f32 %v104, %v124
  %v147 = vadd.f32 %v105, %v124
  %v148 = vadd.f32 %v106, %v124
  %v149 = vadd.f32 %v107, %v124
  %v150 = vmax.f32 %v126, 0.0
  %v151 = vmax.f32 %v127, 0.0
  %v152 = vmax.f32 %v128, 0.0
  %v153 = vmax.f32 %v129, 0.0
  %v154 = vmax.f32 %v130, 0.0
  %v155 = vmax.f32 %v131, 0.0
  %v156 = vmax.f32 %v132, 0.0
  %v157 = vmax.f32 %v133, 0.0
  %v158 = vmax.f32 %v134, 0.0
  %v159 = vmax.f32 %v135, 0.0
  %v160 = vmax.f32 %v136, 0.0
  %v161 = vmax.f32 %v137, 0.0
  %v162 = vmax.f32 %v138, 0.0
  %v163 = vmax.f32 %v139, 0.0
  %v164 = vmax.f32 %v140, 0.0
  %v165 = vmax.f32 %v141, 0.0
  %v166 = vmax.f32 %v142, 0.0
  %v167 = vmax.f32 %v143, 0.0
  %v168 = vmax.f32 %v144, 0.0
  %v169 = vmax.f32 %v145, 0.0
  %v170 = vmax.f32 %v146, 0.0
  %v171 = vmax.f32 %v147, 0.0
  %v172 = vmax.f32 %v148, 0.0
  %v173 = vmax.f32 %v149, 0.0
  %175 = vset.pattern.permute.xlu0 0
  %176 = vperm.xlu0 %175, %v25
  %v177 = vpop.permute.xlu0 %176
  %180 = vset.pattern.permute.xlu0 0
  %181 = vperm.xlu0 %180, %v26
  %v182 = vpop.permute.xlu0 %181
  %185 = vset.pattern.permute.xlu0 0
  %186 = vperm.xlu0 %185, %v27
  %v187 = vpop.permute.xlu0 %186
  %v189 = vmul.f32 %v177, %v150
  %v190 = vmul.f32 %v177, %v151
  %v191 = vmul.f32 %v177, %v152
  %v192 = vmul.f32 %v177, %v153
  %v193 = vmul.f32 %v177, %v154
  %v194 = vmul.f32 %v177, %v155
  %v195 = vmul.f32 %v177, %v156
  %v196 = vmul.f32 %v177, %v157
  %v197 = vmul.f32 %v182, %v158
  %v198 = vmul.f32 %v182, %v159
  %v199 = vmul.f32 %v182, %v160
  %v200 = vmul.f32 %v182, %v161
  %v201 = vmul.f32 %v182, %v162
  %v202 = vmul.f32 %v182, %v163
  %v203 = vmul.f32 %v182, %v164
  %v204 = vmul.f32 %v182, %v165
  %v205 = vmul.f32 %v187, %v166
  %v206 = vmul.f32 %v187, %v167
  %v207 = vmul.f32 %v187, %v168
  %v208 = vmul.f32 %v187, %v169
  %v209 = vmul.f32 %v187, %v170
  %v210 = vmul.f32 %v187, %v171
  %v211 = vmul.f32 %v187, %v172
  %v212 = vmul.f32 %v187, %v173
  %v213 = vadd.f32 %v189, %v197
  %v214 = vadd.f32 %v213, %v205
  %v215 = vrot.slane %v214, 4
  %v216 = vadd.f32 %v214, %v215
  %v217 = vrot.slane %v216, 2
  %v218 = vadd.f32 %v216, %v217
  %v219 = vrot.slane %v218, 1
  %v220 = vadd.f32 %v218, %v219
  %v221 = vadd.f32 %v190, %v198
  %v222 = vadd.f32 %v221, %v206
  %v223 = vrot.slane %v222, 4
  %v224 = vadd.f32 %v222, %v223
  %v225 = vrot.slane %v224, 2
  %v226 = vadd.f32 %v224, %v225
  %v227 = vrot.slane %v226, 1
  %v228 = vadd.f32 %v226, %v227
  %v229 = vadd.f32 %v191, %v199
  %v230 = vadd.f32 %v229, %v207
  %v231 = vrot.slane %v230, 4
  %v232 = vadd.f32 %v230, %v231
  %v233 = vrot.slane %v232, 2
  %v234 = vadd.f32 %v232, %v233
  %v235 = vrot.slane %v234, 1
  %v236 = vadd.f32 %v234, %v235
  %v237 = vadd.f32 %v192, %v200
  %v238 = vadd.f32 %v237, %v208
  %v239 = vrot.slane %v238, 4
  %v240 = vadd.f32 %v238, %v239
  %v241 = vrot.slane %v240, 2
  %v242 = vadd.f32 %v240, %v241
  %v243 = vrot.slane %v242, 1
  %v244 = vadd.f32 %v242, %v243
  %v245 = vadd.f32 %v193, %v201
  %v246 = vadd.f32 %v245, %v209
  %v247 = vrot.slane %v246, 4
  %v248 = vadd.f32 %v246, %v247
  %v249 = vrot.slane %v248, 2
  %v250 = vadd.f32 %v248, %v249
  %v251 = vrot.slane %v250, 1
  %v252 = vadd.f32 %v250, %v251
  %v253 = vadd.f32 %v194, %v202
  %v254 = vadd.f32 %v253, %v210
  %v255 = vrot.slane %v254, 4
  %v256 = vadd.f32 %v254, %v255
  %v257 = vrot.slane %v256, 2
  %v258 = vadd.f32 %v256, %v257
  %v259 = vrot.slane %v258, 1
  %v260 = vadd.f32 %v258, %v259
  %v261 = vadd.f32 %v195, %v203
  %v262 = vadd.f32 %v261, %v211
  %v263 = vrot.slane %v262, 4
  %v264 = vadd.f32 %v262, %v263
  %v265 = vrot.slane %v264, 2
  %v266 = vadd.f32 %v264, %v265
  %v267 = vrot.slane %v266, 1
  %v268 = vadd.f32 %v266, %v267
  %v269 = vadd.f32 %v196, %v204
  %v270 = vadd.f32 %v269, %v212
  %v271 = vrot.slane %v270, 4
  %v272 = vadd.f32 %v270, %v271
  %v273 = vrot.slane %v272, 2
  %v274 = vadd.f32 %v272, %v273
  %v275 = vrot.slane %v274, 1
  %v276 = vadd.f32 %v274, %v275
  %s277 = sld [smem:[#allocation2]]
  %v278 = vstv %s277
  %v279 = vadd.f32 %v220, %v278
  %v280 = vadd.f32 %v228, %v278
  %v281 = vadd.f32 %v236, %v278
  %v282 = vadd.f32 %v244, %v278
  %v283 = vadd.f32 %v252, %v278
  %v284 = vadd.f32 %v260, %v278
  %v285 = vadd.f32 %v268, %v278
  %v286 = vadd.f32 %v276, %v278
  %v295 = vcombine.low %v279, %v280
  %v296 = vcombine.low %v281, %v282
  %v297 = vcombine.low %v283, %v284
  %v298 = vcombine.low %v285, %v286
  %v300 = vunpack.c.l.s4 1966171168
  %v301 = vunpack.c.0.s8 %v300
  %v302 = vlaneseq
  %v303 = vshrl.u32 %v302, 7
  %v304 = vsub.s32 %v301, %v303
  %v305 = vrot.slane %v295, %v304
  %v307 = vunpack.c.l.s4 1966171168
  %v308 = vunpack.c.0.s8 %v307
  %v309 = vlaneseq
  %v310 = vshrl.u32 %v309, 7
  %v311 = vsub.s32 %v308, %v310
  %v312 = vrot.slane %v296, %v311
  %v314 = vunpack.c.l.s4 1966171168
  %v315 = vunpack.c.0.s8 %v314
  %v316 = vlaneseq
  %v317 = vshrl.u32 %v316, 7
  %v318 = vsub.s32 %v315, %v317
  %v319 = vrot.slane %v297, %v318
  %v321 = vunpack.c.l.s4 1966171168
  %v322 = vunpack.c.0.s8 %v321
  %v323 = vlaneseq
  %v324 = vshrl.u32 %v323, 7
  %v325 = vsub.s32 %v322, %v324
  %v326 = vrot.slane %v298, %v325
  %v327 = vcombine.low %v305, %v312
  %v328 = vcombine.low %v319, %v326
  %v330 = vunpack.c.l.s4 1966171168
  %v331 = vunpack.c.0.s8 %v330
  %v332 = vlaneseq
  %v333 = vshrl.u32 %v332, 7
  %v334 = vsub.s32 %v331, %v333
  %v335 = vrot.slane %v327, %v334
  %v337 = vunpack.c.l.s4 1966171168
  %v338 = vunpack.c.0.s8 %v337
  %v339 = vlaneseq
  %v340 = vshrl.u32 %v339, 7
  %v341 = vsub.s32 %v338, %v340
  %v342 = vrot.slane %v328, %v341
  %v343 = vcombine.low %v335, %v342
  %345 = vst [vmem:[%s5] sm:$0xff] %v343
  // Predicated region
  $region22: #{net_forward.1} parent=0 // pred_check
    _
  $region23: #{net_forward.1} parent=0 // pred_check_branch
    %347 = sbr.rel (0) target = $region25
  $region24: #{net_forward.1} parent=0 // pred_region
    _
  $region25: #{net_forward.1} parent=0 // pred_fallthru
    _
  // Predicated region
  $region26: #{net_forward.1} parent=0 // pred_check
    _
  $region27: #{net_forward.1} parent=0 // pred_check_branch
    %349 = sbr.rel (0) target = $region29
  $region28: #{net_forward.1} parent=0 // pred_region
    _
  $region29: #{net_forward.1} parent=0 // pred_fallthru
    _

</llo_original>
